<compile_context>
chip_gen: v5e
topology: v5e:2x2
jax: 0.10.0
libtpu: 0.0.40
codegen_flags: <defaults>
</compile_context>

<pallas_src>
import functools

import jax
import jax.numpy as jnp
from jax.experimental import pallas as pl
from jax.experimental.pallas import tpu as pltpu


def _round_up(x, m):
    return (x + m - 1) // m * m


# ---------------------------------------------------------------------------
# Kernel: whole forward hot path on one (TB, SZp) batch tile.
#
# Packed weight slab (R, F), bf16, one chunk per layer:
#   chunk 0        : first hidden layer, rows = round_up(S+Z, 8)
#   chunk i (1..L-1): hidden layer i,     rows = round_up(hidden[i-1], 8)
#   chunk L        : fused heads [pi|mu|sigma], rows = round_up(hidden[-1], 8)
# All chunks are zero-padded to F output lanes; padding rows/cols are zero so
# every padded matmul is exact, and ReLU(0)=0 keeps the padding zero.
# Bias slab (L+1, F), f32: row i = bias of layer i (heads bias fused in row L).
# ---------------------------------------------------------------------------
def _mdn_kernel(offs, rows, L, K, KA, x_ref, w_ref, b_ref, out_ref):
    # first hidden layer: x is already the concatenated (state, z) tile (bf16).
    y = jnp.dot(x_ref[...], w_ref[offs[0]:offs[0] + rows[0], :],
                preferred_element_type=jnp.float32) + b_ref[0:1, :]
    h = jnp.maximum(y, 0.0)

    # remaining hidden layers + fused heads.  The contraction is sliced to the
    # 8-aligned true fan_in; padded lanes of h are exactly zero -> exact.
    for i in range(1, L + 1):
        hb = h[:, :rows[i]].astype(w_ref.dtype)
        y = jnp.dot(hb, w_ref[offs[i]:offs[i] + rows[i], :],
                    preferred_element_type=jnp.float32) + b_ref[i:i + 1, :]
        if i < L:
            h = jnp.maximum(y, 0.0)

    # Epilogue on the fused head slab y = [pi_logits | mu | log_sigma | pad].
    col = jax.lax.broadcasted_iota(jnp.int32, y.shape, 1)
    pi_mask = col < K                    # softmax region
    sigma_mask = col >= (K + KA)         # exp region (incl. harmless padding)

    big_neg = jnp.float32(-1e30)
    m = jnp.max(jnp.where(pi_mask, y, big_neg), axis=-1, keepdims=True)

    # Single EUP exp pass covering both the softmax numerator and exp(sigma).
    # mu lanes get exp(0)=1 which is discarded by the final select (safe under
    # where/select semantics even if other branches were inf).
    t = jnp.where(pi_mask, y - m, jnp.where(sigma_mask, y, 0.0))
    e = jnp.exp(t)
    s = jnp.sum(jnp.where(pi_mask, e, 0.0), axis=-1, keepdims=True)
    pi_vals = e / s                      # exact normalization (rows sum to 1)

    out = jnp.where(pi_mask, pi_vals, jnp.where(sigma_mask, e, y))
    out_ref[...] = out.astype(out_ref.dtype)


# ---------------------------------------------------------------------------
# Parameter init (mimics nn.Linear's uniform(-1/sqrt(fan_in), 1/sqrt(fan_in)))
# ---------------------------------------------------------------------------
def init_mdn_params(key, state_dim, action_dim, hidden_layers, latent_dim, K):
    input_dim = state_dim + latent_dim
    dims_in = [input_dim] + list(hidden_layers[:-1])
    dims_out = list(hidden_layers)

    params = {"hidden": [], "heads": {}}

    def linear(key, fan_in, fan_out):
        kw, kb = jax.random.split(key)
        bound = 1.0 / jnp.sqrt(jnp.float32(fan_in))
        w = jax.random.uniform(kw, (fan_in, fan_out), jnp.float32, -bound, bound)
        b = jax.random.uniform(kb, (1, fan_out), jnp.float32, -bound, bound)
        return w, b

    keys = jax.random.split(key, len(dims_out) + 3)
    for i, (di, do) in enumerate(zip(dims_in, dims_out)):
        params["hidden"].append(linear(keys[i], di, do))

    last = hidden_layers[-1]
    params["heads"]["pi"] = linear(keys[-3], last, K)
    params["heads"]["mu"] = linear(keys[-2], last, K * action_dim)
    params["heads"]["sigma"] = linear(keys[-1], last, K * action_dim)
    return params


def _pack_params(params, state_dim, latent_dim, hidden_layers, K, action_dim,
                 F, compute_dtype):
    """Pack all weights into one (R, F) slab (R = sum of 8-aligned fan_ins)."""
    L = len(hidden_layers)
    S, Z = state_dim, latent_dim
    out_total = K + 2 * K * action_dim

    fan_ins = [S + Z] + list(hidden_layers[:-1]) + [hidden_layers[-1]]
    rows = [_round_up(f, 8) for f in fan_ins]
    offs = [0]
    for r in rows[:-1]:
        offs.append(offs[-1] + r)
    R = offs[-1] + rows[-1]

    w_pack = jnp.zeros((R, F), jnp.float32)
    b_pack = jnp.zeros((L + 1, F), jnp.float32)

    for i in range(L):
        wi, bi = params["hidden"][i]
        di, do = wi.shape
        w_pack = w_pack.at[offs[i]:offs[i] + di, :do].set(wi)
        b_pack = b_pack.at[i, :do].set(bi[0])

    w_pi, b_pi = params["heads"]["pi"]
    w_mu, b_mu = params["heads"]["mu"]
    w_sg, b_sg = params["heads"]["sigma"]
    w_heads = jnp.concatenate([w_pi, w_mu, w_sg], axis=1)     # (h_last, K+2KA)
    b_heads = jnp.concatenate([b_pi, b_mu, b_sg], axis=1)
    dh, do = w_heads.shape
    assert do == out_total
    w_pack = w_pack.at[offs[L]:offs[L] + dh, :do].set(w_heads)
    b_pack = b_pack.at[L, :do].set(b_heads[0])

    return w_pack.astype(compute_dtype), b_pack, tuple(offs), tuple(rows)


# ---------------------------------------------------------------------------
# Wrapper: packing, batch tiling, pallas_call plumbing, output split.
# ---------------------------------------------------------------------------
def mdn_forward(params, z, state, K, action_dim, hidden_layers,
                compute_dtype=jnp.bfloat16):
    B, S = state.shape
    Z = z.shape[1]
    L = len(hidden_layers)
    KA = K * action_dim
    out_total = K + 2 * KA
    F = _round_up(max([out_total] + list(hidden_layers)), 128)

    w_pack, b_pack, offs, rows = _pack_params(
        params, S, Z, hidden_layers, K, action_dim, F, compute_dtype)
    SZp = rows[0]
    R = w_pack.shape[0]

    # Batch tiling: tiny batches run as one tile (per-step overhead dominates);
    # otherwise aim for >=2 grid steps so v7x's two TensorCores both get work,
    # with tiles capped at 1024 rows (well under VMEM limits at F=128).
    pB = _round_up(max(B, 1), 8)
    if pB <= 64:
        TB = pB
    else:
        TB = min(_round_up((pB + 1) // 2, 8), 1024)
    padded_B = _round_up(pB, TB)

    # Host-side concat of (state, z) is trivial layout plumbing; pad cols to
    # the 8-aligned fan_in and rows to the padded batch.
    x = jnp.concatenate([state, z], axis=1).astype(compute_dtype)
    x = jnp.pad(x, ((0, padded_B - B), (0, SZp - (S + Z))))

    kernel = functools.partial(_mdn_kernel, offs, rows, L, K, KA)

    flops = 2 * padded_B * F * sum(rows)
    transcendentals = padded_B * F
    bytes_accessed = (x.size * x.dtype.itemsize
                      + w_pack.size * w_pack.dtype.itemsize
                      + b_pack.size * 4
                      + padded_B * F * 4)

    # Note: weights/biases are grid-resident (index_map -> (0, 0)).  At F=128
    # the default double-buffered copy is ~40 KiB and irrelevant; if hidden
    # widths grow, single-buffer them (pipeline_mode=pl.Buffered(1)) and set
    # vmem_limit_bytes explicitly.
    out = pl.pallas_call(
        kernel,
        out_shape=jax.ShapeDtypeStruct((padded_B, F), jnp.float32),
        grid=(padded_B // TB,),
        in_specs=[
            pl.BlockSpec((TB, SZp), lambda i: (i, 0)),       # (state|z) tile
            pl.BlockSpec((R, F), lambda i: (0, 0)),          # weights, resident
            pl.BlockSpec((L + 1, F), lambda i: (0, 0)),      # biases, resident
        ],
        out_specs=pl.BlockSpec((TB, F), lambda i: (i, 0)),   # lane-dense slab
        compiler_params=pltpu.CompilerParams(
            dimension_semantics=("parallel",),
        ),
        cost_estimate=pl.CostEstimate(
            flops=flops,
            transcendentals=transcendentals,
            bytes_accessed=bytes_accessed,
        ),
    )(x, w_pack, b_pack)

    # Only the sliced views below are valid; padded slab lanes hold exp(0)=1.
    out = out[:B]
    pi = out[:, :K]
    mu = out[:, K:K + KA]
    sigma = out[:, K + KA:K + 2 * KA]
    return pi, mu, sigma


# Pure-JAX reference (same math, no Pallas).  compute_dtype=jnp.bfloat16
# reproduces the kernel's weight/activation quantization; jnp.float32 gives
# the original full-precision module semantics.
def mdn_forward_ref(params, z, state, compute_dtype=jnp.float32):
    x = jnp.concatenate([state, z], axis=1).astype(compute_dtype)
    for w, b in params["hidden"]:
        h = jnp.dot(x, w.astype(compute_dtype),
                    preferred_element_type=jnp.float32) + b
        x = jnp.maximum(h, 0.0).astype(compute_dtype)

    def head(name):
        w, b = params["heads"][name]
        return jnp.dot(x, w.astype(compute_dtype),
                       preferred_element_type=jnp.float32) + b

    pi = jax.nn.softmax(head("pi"), axis=1)
    mu = head("mu")
    sigma = jnp.exp(head("sigma"))
    return pi, mu, sigma


if __name__ == "__main__":
    # Small shapes consistent with the module's forward.
    state_dim = 12
    latent_dim = 4
    action_dim = 4
    hidden_layers = [32, 32]
    K = 8
    batch = 8

    key = jax.random.PRNGKey(0)
    kp, kz, ks = jax.random.split(key, 3)
    params = init_mdn_params(kp, state_dim, action_dim, hidden_layers,
                             latent_dim, K)
    z = jax.random.normal(kz, (batch, latent_dim), jnp.float32)
    state = jax.random.normal(ks, (batch, state_dim), jnp.float32)

    pi, mu, sigma = mdn_forward(params, z, state, K, action_dim, hidden_layers)
    pi, mu, sigma = jax.block_until_ready((pi, mu, sigma))

    assert pi.shape == (batch, K)
    assert mu.shape == (batch, K * action_dim)
    assert sigma.shape == (batch, K * action_dim)

    # Exact softmax normalization (no approx reciprocal any more).
    assert jnp.allclose(jnp.sum(pi, axis=-1), 1.0, atol=1e-3)

    # Tight check vs. a reference using the same bf16 weight/activation
    # quantization (differences are only accumulation order).
    pi_q, mu_q, sg_q = mdn_forward_ref(params, z, state,
                                       compute_dtype=jnp.bfloat16)
    assert jnp.allclose(pi, pi_q, atol=2e-3, rtol=2e-3)
    assert jnp.allclose(mu, mu_q, atol=2e-3, rtol=2e-3)
    assert jnp.allclose(sigma, sg_q, atol=2e-3, rtol=2e-3)

    # Loose sanity check vs. the full-f32 module semantics (bf16 MXU noise).
    pi_f, mu_f, sg_f = mdn_forward_ref(params, z, state,
                                       compute_dtype=jnp.float32)
    assert jnp.allclose(pi, pi_f, atol=5e-2)
    assert jnp.allclose(mu, mu_f, atol=1e-1, rtol=1e-1)
    assert jnp.allclose(sigma, sg_f, atol=1e-1, rtol=1e-1)

    print("KERNEL_OK")
</pallas_src>

<mosaic_0001>
module attributes {stable_mosaic.version = 11 : i64} {
  func.func @_mdn_kernel(%arg0: i32, %arg1: memref<8x16xbf16, #tpu.memory_space<vmem>>, %arg2: memref<80x128xbf16, #tpu.memory_space<vmem>>, %arg3: memref<3x128xf32, #tpu.memory_space<vmem>>, %arg4: memref<8x128xf32, #tpu.memory_space<vmem>>) attributes {dimension_semantics = [#tpu.dimension_semantics<parallel>], iteration_bounds = array<i64: 1>, scalar_prefetch = 0 : i64, scratch_operands = 0 : i64, tpu.core_type = #tpu.core_type<tc>, window_params = [{transform_indices = @transform_0, window_bounds = array<i64: 8, 16>}, {pipeline_mode = #tpu.pipeline_mode<synchronous>, transform_indices = @transform_1, window_bounds = array<i64: 80, 128>}, {pipeline_mode = #tpu.pipeline_mode<synchronous>, transform_indices = @transform_2, window_bounds = array<i64: 3, 128>}, {transform_indices = @transform_3, window_bounds = array<i64: 8, 128>}]} {
    %c0 = arith.constant 0 : index
    %c0_0 = arith.constant 0 : index
    %0 = vector.load %arg1[%c0, %c0_0] : memref<8x16xbf16, #tpu.memory_space<vmem>>, vector<8x16xbf16>
    %c0_1 = arith.constant 0 : index
    %c0_2 = arith.constant 0 : index
    %1 = vector.load %arg2[%c0_1, %c0_2] : memref<80x128xbf16, #tpu.memory_space<vmem>>, vector<16x128xbf16>
    %cst = arith.constant dense<0.000000e+00> : vector<8x128xf32>
    %2 = tpu.matmul %0, %1, %cst {dimension_numbers = #tpu.dot_dimension_numbers<[1], [0], [0], [1], [0, 0, 1, 1], [], []>} : vector<8x16xbf16>, vector<16x128xbf16>, vector<8x128xf32> -> vector<8x128xf32>
    %c0_3 = arith.constant 0 : index
    %c0_4 = arith.constant 0 : index
    %3 = vector.load %arg3[%c0_3, %c0_4] : memref<3x128xf32, #tpu.memory_space<vmem>>, vector<1x128xf32>
    %4 = vector.broadcast %3 : vector<1x128xf32> to vector<8x128xf32>
    %5 = arith.addf %2, %4 : vector<8x128xf32>
    %cst_5 = arith.constant 0.000000e+00 : f32
    %6 = vector.broadcast %cst_5 : f32 to vector<8x128xf32>
    %7 = arith.maximumf %5, %6 : vector<8x128xf32>
    %8 = vector.extract_strided_slice %7 {offsets = [0, 0], sizes = [8, 32], strides = [1, 1]} : vector<8x128xf32> to vector<8x32xf32>
    %9 = arith.truncf %8 : vector<8x32xf32> to vector<8x32xbf16>
    %c16 = arith.constant 16 : index
    %c0_6 = arith.constant 0 : index
    %10 = vector.load %arg2[%c16, %c0_6] : memref<80x128xbf16, #tpu.memory_space<vmem>>, vector<32x128xbf16>
    %cst_7 = arith.constant dense<0.000000e+00> : vector<8x128xf32>
    %11 = tpu.matmul %9, %10, %cst_7 {dimension_numbers = #tpu.dot_dimension_numbers<[1], [0], [0], [1], [0, 0, 1, 1], [], []>} : vector<8x32xbf16>, vector<32x128xbf16>, vector<8x128xf32> -> vector<8x128xf32>
    %c1 = arith.constant 1 : index
    %c0_8 = arith.constant 0 : index
    %12 = vector.load %arg3[%c1, %c0_8] : memref<3x128xf32, #tpu.memory_space<vmem>>, vector<1x128xf32>
    %13 = vector.broadcast %12 : vector<1x128xf32> to vector<8x128xf32>
    %14 = arith.addf %11, %13 : vector<8x128xf32>
    %cst_9 = arith.constant 0.000000e+00 : f32
    %15 = vector.broadcast %cst_9 : f32 to vector<8x128xf32>
    %16 = arith.maximumf %14, %15 : vector<8x128xf32>
    %17 = vector.extract_strided_slice %16 {offsets = [0, 0], sizes = [8, 32], strides = [1, 1]} : vector<8x128xf32> to vector<8x32xf32>
    %18 = arith.truncf %17 : vector<8x32xf32> to vector<8x32xbf16>
    %c48 = arith.constant 48 : index
    %c0_10 = arith.constant 0 : index
    %19 = vector.load %arg2[%c48, %c0_10] : memref<80x128xbf16, #tpu.memory_space<vmem>>, vector<32x128xbf16>
    %cst_11 = arith.constant dense<0.000000e+00> : vector<8x128xf32>
    %20 = tpu.matmul %18, %19, %cst_11 {dimension_numbers = #tpu.dot_dimension_numbers<[1], [0], [0], [1], [0, 0, 1, 1], [], []>} : vector<8x32xbf16>, vector<32x128xbf16>, vector<8x128xf32> -> vector<8x128xf32>
    %c2 = arith.constant 2 : index
    %c0_12 = arith.constant 0 : index
    %21 = vector.load %arg3[%c2, %c0_12] : memref<3x128xf32, #tpu.memory_space<vmem>>, vector<1x128xf32>
    %22 = vector.broadcast %21 : vector<1x128xf32> to vector<8x128xf32>
    %23 = arith.addf %20, %22 : vector<8x128xf32>
    %24 = tpu.iota {dimensions = array<i32: 1>} : vector<8x128xi32>
    %c8_i32 = arith.constant 8 : i32
    %25 = vector.broadcast %c8_i32 : i32 to vector<8x128xi32>
    %26 = arith.cmpi slt, %24, %25 : vector<8x128xi32>
    %c40_i32 = arith.constant 40 : i32
    %27 = vector.broadcast %c40_i32 : i32 to vector<8x128xi32>
    %28 = arith.cmpi sge, %24, %27 : vector<8x128xi32>
    %cst_13 = arith.constant -1.000000e+30 : f32
    %29 = vector.broadcast %cst_13 : f32 to vector<8x128xf32>
    %30 = arith.select %26, %23, %29 : vector<8x128xi1>, vector<8x128xf32>
    %cst_14 = arith.constant dense<0xFF800000> : vector<8xf32>
    %31 = vector.multi_reduction <maximumf>, %30, %cst_14 [1] : vector<8x128xf32> to vector<8xf32>
    %32 = vector.shape_cast %31 : vector<8xf32> to vector<8x1xf32>
    %33 = vector.broadcast %32 : vector<8x1xf32> to vector<8x128xf32>
    %34 = arith.subf %23, %33 : vector<8x128xf32>
    %cst_15 = arith.constant 0.000000e+00 : f32
    %35 = vector.broadcast %cst_15 : f32 to vector<8x128xf32>
    %36 = arith.select %28, %23, %35 : vector<8x128xi1>, vector<8x128xf32>
    %37 = arith.select %26, %34, %36 : vector<8x128xi1>, vector<8x128xf32>
    %38 = math.exp %37 : vector<8x128xf32>
    %cst_16 = arith.constant 0.000000e+00 : f32
    %39 = vector.broadcast %cst_16 : f32 to vector<8x128xf32>
    %40 = arith.select %26, %38, %39 : vector<8x128xi1>, vector<8x128xf32>
    %cst_17 = arith.constant dense<0.000000e+00> : vector<8xf32>
    %41 = vector.multi_reduction <add>, %40, %cst_17 [1] : vector<8x128xf32> to vector<8xf32>
    %42 = vector.shape_cast %41 : vector<8xf32> to vector<8x1xf32>
    %43 = vector.broadcast %42 : vector<8x1xf32> to vector<8x128xf32>
    %44 = arith.divf %38, %43 : vector<8x128xf32>
    %45 = arith.select %28, %38, %23 : vector<8x128xi1>, vector<8x128xf32>
    %46 = arith.select %26, %44, %45 : vector<8x128xi1>, vector<8x128xf32>
    %c0_18 = arith.constant 0 : index
    %c0_19 = arith.constant 0 : index
    %47 = vector.load %arg4[%c0_18, %c0_19] : memref<8x128xf32, #tpu.memory_space<vmem>>, vector<8x128xf32>
    tpu.vector_store %arg4[%c0_18, %c0_19], %46 {strides = array<i32>} : memref<8x128xf32, #tpu.memory_space<vmem>>, vector<8x128xf32>,
    return
  }
  func.func @transform_0(%arg0: i32) -> (i32, i32) {
    %c0_i32 = arith.constant 0 : i32
    %c0_i32_0 = arith.constant 0 : i32
    return %arg0, %c0_i32 : i32, i32
  }
  func.func @transform_1(%arg0: i32) -> (i32, i32) {
    %c0_i32 = arith.constant 0 : i32
    %c0_i32_0 = arith.constant 0 : i32
    %c0_i32_1 = arith.constant 0 : i32
    return %c0_i32, %c0_i32_0 : i32, i32
  }
  func.func @transform_2(%arg0: i32) -> (i32, i32) {
    %c0_i32 = arith.constant 0 : i32
    %c0_i32_0 = arith.constant 0 : i32
    %c0_i32_1 = arith.constant 0 : i32
    return %c0_i32, %c0_i32_0 : i32, i32
  }
  func.func @transform_3(%arg0: i32) -> (i32, i32) {
    %c0_i32 = arith.constant 0 : i32
    %c0_i32_0 = arith.constant 0 : i32
    return %arg0, %c0_i32 : i32, i32
  }
}

</mosaic_0001>

<llo_original>
// kernel: tpu_custom_call.1
$region0: #{tpu_custom_call.1}
  #allocation0 [shape = 'u32[]', space=smem, size = 0x4, offset = 0x4, fixed_abs, tag = 'smem constant byte address 0x4 - core index']
  #allocation1 [shape = 'u32[72,128]{1,0:T(1,128)}', space=vmem, size = 0x9000, scoped, tag = 'internal scratch']
  %s0 = inlined_call_operand.hbm [shape: bf16[8,16], index: 0, kind: input, shape index: {}]
  %s1 = inlined_call_operand.hbm [shape: bf16[80,128], index: 1, kind: input, shape index: {}]
  %s2 = inlined_call_operand.hbm [shape: f32[3,128], index: 2, kind: input, shape index: {}]
  %s3 = inlined_call_operand.hbm [shape: f32[8,128], index: 3, kind: output, shape index: {}]
  %s4 = sld [smem:[#allocation0]]
  $region34: #{tpu_custom_call.1} parent=0
    _
  %s6 = ssub.s32 1, %s4
  %s7 = scalar_select 0, %s6, %s4
  $region1: #{tpu_custom_call.1} parent=0
    #allocation2 [shape = 'u8[2048]{0}', space=vmem, size = 0x800, scoped, tag = 'input window, operand 0, single buffered']
    #allocation3 [shape = 's32[1]{0}', space=sflag, size = 0x4, scoped, tag = 'scoped memory for tpu_custom_call.1']
    #allocation4 [shape = 's32[1]{0}', space=sflag, size = 0x4, scoped, tag = 'scoped memory for tpu_custom_call.1']
    #allocation5 [shape = 'u8[20480]{0}', space=vmem, size = 0x5000, scoped, tag = 'input window, operand 1, single buffered']
    #allocation6 [shape = 's32[1]{0}', space=sflag, size = 0x4, scoped, tag = 'scoped memory for tpu_custom_call.1']
    #allocation7 [shape = 'u8[2048]{0}', space=vmem, size = 0x800, scoped, tag = 'input window, operand 2, single buffered']
    #allocation8 [shape = 'u8[4096]{0}', space=vmem, size = 0x1000, scoped, tag = 'output window, operand 0, single buffered']
    %8 = vsyncpa [#allocation3], 0
    %9 = vsyncpa [#allocation6], 0
    %10 = vsyncpa [#allocation4], 0
    // Predicated region
    $region2: #{tpu_custom_call.1} parent=1 // pred_check
      _
    $region3: #{tpu_custom_call.1} parent=1 // pred_check_branch
      %12 = sbr.rel (0) target = $region5
    $region4: #{tpu_custom_call.1} parent=1 // pred_region
      %14 = vsyncadd [#allocation3], 0
      %s16 = sshll.u32 %s0, 4
      %s17 = int_to_ptr.hbm [resolvable:$true] %s16
      %s18 = sshll.u32 [#allocation2], 4
      %s19 = int_to_ptr.vmem [resolvable:$true] %s18
      %21 = dma.hbm_to_vmem [thread:$0]  %s17, 64, %s19, [#allocation3]
    $region5: #{tpu_custom_call.1} parent=1 // pred_fallthru
      _
    // Predicated region
    $region6: #{tpu_custom_call.1} parent=1 // pred_check
      _
    $region7: #{tpu_custom_call.1} parent=1 // pred_check_branch
      %23 = sbr.rel (0) target = $region9
    $region8: #{tpu_custom_call.1} parent=1 // pred_region
      %25 = vsyncadd [#allocation6], 0
      %s26 = sshll.u32 %s1, 4
      %s27 = int_to_ptr.hbm [resolvable:$true] %s26
      %s28 = sshll.u32 [#allocation5], 4
      %s29 = int_to_ptr.vmem [resolvable:$true] %s28
      %34 = dma.hbm_to_vmem [thread:$0]  %s27, 640, %s29, [#allocation6], 64, 64, 4
    $region9: #{tpu_custom_call.1} parent=1 // pred_fallthru
      _
    // Predicated region
    $region10: #{tpu_custom_call.1} parent=1 // pred_check
      _
    $region11: #{tpu_custom_call.1} parent=1 // pred_check_branch
      %36 = sbr.rel (0) target = $region13
    $region12: #{tpu_custom_call.1} parent=1 // pred_region
      %38 = vsyncadd [#allocation6], 0
      %s40 = sshll.u32 %s2, 4
      %s41 = int_to_ptr.hbm [resolvable:$true] %s40
      %s42 = sshll.u32 [#allocation7], 4
      %s43 = int_to_ptr.vmem [resolvable:$true] %s42
      %45 = dma.hbm_to_vmem [thread:$0]  %s41, 64, %s43, [#allocation6]
    $region13: #{tpu_custom_call.1} parent=1 // pred_fallthru
      _
    // Predicated region
    $region14: #{tpu_custom_call.1} parent=1 // pred_check
      _
    $region15: #{tpu_custom_call.1} parent=1 // pred_check_branch
      %47 = sbr.rel (0) target = $region17
    $region16: #{tpu_custom_call.1} parent=1 // pred_region
      %49 = dma.done [#allocation3], 64
    $region17: #{tpu_custom_call.1} parent=1 // pred_fallthru
      _
    // Predicated region
    $region18: #{tpu_custom_call.1} parent=1 // pred_check
      _
    $region19: #{tpu_custom_call.1} parent=1 // pred_check_branch
      %51 = sbr.rel (0) target = $region21
    $region20: #{tpu_custom_call.1} parent=1 // pred_region
      %53 = dma.done [#allocation6], 640
    $region21: #{tpu_custom_call.1} parent=1 // pred_fallthru
      _
    // Predicated region
    $region22: #{tpu_custom_call.1} parent=1 // pred_check
      _
    $region23: #{tpu_custom_call.1} parent=1 // pred_check_branch
      %55 = sbr.rel (0) target = $region25
    $region24: #{tpu_custom_call.1} parent=1 // pred_region
      %57 = dma.done [#allocation6], 64
    $region25: #{tpu_custom_call.1} parent=1 // pred_fallthru
      _
    %v59 = vld [vmem:[#allocation2] sm:$0xf]
    %v60 = vld [vmem:[#allocation5] sm:$0xf]
    %v61 = vld [vmem:[#allocation5 + $0x4] sm:$0xf]
    %v62 = vld [vmem:[#allocation7] sm:$0x1]
    %v63 = vperm.slane %v62, 0
    %v66 = vunpack.c.l.b16 %v60
    %v67 = vunpack.c.l.b16 %v61
    %v68 = vpack.c.b16 %v67, %v66
    %vm70 = vcmask 130048
    %v72 = vsel %vm70, %v59, 0
    %74 = vmatpush.bf16.msra.mxu0 0
    %75 = vmatpush.bf16.msra.mxu0 0
    %76 = vmatpush.bf16.msra.mxu0 0
    %77 = vmatpush.bf16.msra.mxu0 0
    %78 = vmatpush.bf16.msra.mxu0 0
    %79 = vmatpush.bf16.msra.mxu0 0
    %80 = vmatpush.bf16.msra.mxu0 0
    %81 = vmatpush.bf16.msra.mxu0 %v68
    %82 = vmatmul.bf16.gmra.mxu0 %v72
    %v83 = vpop.f32.mrf.mxu0
    %v84 = vadd.f32 %v63, %v83
    %v85 = vpop.f32.mrf.mxu0
    %86 = vdwg.mxu0
    %v87 = vmax.f32 %v84, 0.0
    %v88 = vpack.c.bf16 %v87, %v87
    %v89 = vld [vmem:[#allocation5 + $0x8] sm:$0xf]
    %v90 = vld [vmem:[#allocation5 + $0xc] sm:$0xf]
    %v91 = vld [vmem:[#allocation5 + $0x10] sm:$0xf]
    %v92 = vld [vmem:[#allocation5 + $0x14] sm:$0xf]
    %v93 = vld [vmem:[#allocation7 + $0x1] sm:$0x1]
    %v94 = vperm.slane %v93, 0
    %v99 = vunpack.c.l.b16 %v89
    %v100 = vunpack.c.l.b16 %v90
    %v101 = vunpack.c.l.b16 %v91
    %v102 = vunpack.c.l.b16 %v92
    %v103 = vpack.c.b16 %v100, %v99
    %v104 = vpack.c.b16 %v102, %v101
    %vm107 = vcmask 261120
    %v109 = vsel %vm107, %v88, 0
    %111 = vmatpush.bf16.msra.mxu0 0
    %112 = vmatpush.bf16.msra.mxu0 0
    %113 = vmatpush.bf16.msra.mxu0 0
    %114 = vmatpush.bf16.msra.mxu0 0
    %115 = vmatpush.bf16.msra.mxu0 0
    %116 = vmatpush.bf16.msra.mxu0 0
    %117 = vmatpush.bf16.msra.mxu0 %v104
    %118 = vmatpush.bf16.msra.mxu0 %v103
    %119 = vmatmul.bf16.gmra.mxu0 %v109
    %v120 = vpop.f32.mrf.mxu0
    %v121 = vadd.f32 %v94, %v120
    %v122 = vpop.f32.mrf.mxu0
    %123 = vdwg.mxu0
    %v124 = vmax.f32 %v121, 0.0
    %v125 = vpack.c.bf16 %v124, %v124
    %v126 = vld [vmem:[#allocation5 + $0x18] sm:$0xf]
    %v127 = vld [vmem:[#allocation5 + $0x1c] sm:$0xf]
    %v128 = vld [vmem:[#allocation5 + $0x20] sm:$0xf]
    %v129 = vld [vmem:[#allocation5 + $0x24] sm:$0xf]
    %v130 = vld [vmem:[#allocation7 + $0x2] sm:$0x1]
    %v131 = vperm.slane %v130, 0
    %v136 = vunpack.c.l.b16 %v126
    %v137 = vunpack.c.l.b16 %v127
    %v138 = vunpack.c.l.b16 %v128
    %v139 = vunpack.c.l.b16 %v129
    %v140 = vpack.c.b16 %v137, %v136
    %v141 = vpack.c.b16 %v139, %v138
    %v145 = vsel %vm107, %v125, 0
    %147 = vmatpush.bf16.msra.mxu0 0
    %148 = vmatpush.bf16.msra.mxu0 0
    %149 = vmatpush.bf16.msra.mxu0 0
    %150 = vmatpush.bf16.msra.mxu0 0
    %151 = vmatpush.bf16.msra.mxu0 0
    %152 = vmatpush.bf16.msra.mxu0 0
    %153 = vmatpush.bf16.msra.mxu0 %v141
    %154 = vmatpush.bf16.msra.mxu0 %v140
    %155 = vmatmul.bf16.gmra.mxu0 %v145
    %v156 = vpop.f32.mrf.mxu0
    %v157 = vadd.f32 %v131, %v156
    %v158 = vpop.f32.mrf.mxu0
    %159 = vdwg.mxu0
    %v160 = vlaneseq
    %v161 = vand.u32 %v160, 127
    %vm162 = vcmp.lt.s32.totalorder %v161, 8
    %vm163 = vcmp.ge.s32.totalorder %v161, 40
    %v164 = vsel %vm162, %v157, -1e+30
    %165 = vmax.xlane.f32.xlu0 %v164
    %v166 = vpop.xlane.xlu0 %165
    %v167 = vsub.f32 %v157, %v166
    %v168 = vsel %vm163, %v157, 0.0
    %v169 = vsel %vm162, %v167, %v168
    %v170 = vmul.f32 %v169, 1.442695
    %v171 = vpow.pop %v170
    %v172 = vsel %vm162, %v171, 0.0
    %173 = vadd.xlane.f32.xlu0 %v172
    %v174 = vpop.xlane.xlu0 %173
    %v175 = vrcp.pop %v174
    %v176 = vmul.f32 %v174, %v175
    %v177 = vsub.f32 1.0, %v176
    %v178 = vmul.f32 %v175, %v177
    %v179 = vadd.f32 %v175, %v178
    %vm180 = vweird.f32 %v174
    %vm181 = vweird.f32 %v175
    %vm182 = vmor %vm180, %vm181
    %v183 = vsel %vm182, %v175, %v179
    %v184 = vand.u32 2147483647, %v174
    %vm185 = vcmp.eq.f32.partialorder %v184, 8.507059e+37
    %v186 = vand.u32 %v174, 2147483648
    %v187 = vor.u32 1.1754944e-38, %v186
    %v188 = vsel %vm185, %v187, %v183
    %v189 = vmul.f32 %v171, %v188
    %v190 = vsel %vm163, %v171, %v157
    %v191 = vsel %vm162, %v189, %v190
    %192 = vst [vmem:[#allocation8] sm:$0xff] %v191
    // Predicated region
    $region26: #{tpu_custom_call.1} parent=1 // pred_check
      _
    $region27: #{tpu_custom_call.1} parent=1 // pred_check_branch
      %194 = sbr.rel (0) target = $region29
    $region28: #{tpu_custom_call.1} parent=1 // pred_region
      %196 = vsyncadd [#allocation4], 0
      %s198 = sshll.u32 [#allocation8], 4
      %s199 = int_to_ptr.vmem [resolvable:$true] %s198
      %s200 = sshll.u32 %s3, 4
      %s201 = int_to_ptr.hbm [resolvable:$true] %s200
      %203 = dma.vmem_to_hbm [thread:$0]  %s199, 128, %s201, [#allocation4]
    $region29: #{tpu_custom_call.1} parent=1 // pred_fallthru
      _
    // Predicated region
    $region30: #{tpu_custom_call.1} parent=1 // pred_check
      _
    $region31: #{tpu_custom_call.1} parent=1 // pred_check_branch
      %205 = sbr.rel (0) target = $region33
    $region32: #{tpu_custom_call.1} parent=1 // pred_region
      %207 = dma.done [#allocation4], 128
    $region33: #{tpu_custom_call.1} parent=1 // pred_fallthru
      _
    %208 = vsyncpa [#allocation3], 1
    %209 = vsyncpa [#allocation6], 1
    %210 = vsyncpa [#allocation4], 1

</llo_original>
